<compile_context>
chip_gen: v5e
topology: v5e:2x2
jax: 0.10.0
libtpu: 0.0.40
codegen_flags: <defaults>
</compile_context>

<pallas_src>
import jax
import jax.numpy as jnp
from jax.experimental import pallas as pl
from jax.experimental.pallas import tpu as pltpu


NEG_INF = -1e30
LANES = 128


def _round_up(x: int, m: int) -> int:
    return (x + m - 1) // m * m


def mlp_softmax_kernel(x_ref, w1_ref, b1_ref, w2_ref, b2_ref, o_ref):
    # Linear(in_features -> hidden) in f32 (memory-bound; f32 matmul is free).
    h = jnp.dot(x_ref[...], w1_ref[...], preferred_element_type=jnp.float32)
    h = jnp.maximum(h + b1_ref[...], 0.0)                  # bias + ReLU

    # Linear(hidden -> out_pad): logits computed lane-dense (padded to 128)
    # in VMEM only; padded lanes carry a -1e30 bias so exp() kills them.
    logits = jnp.dot(h, w2_ref[...], preferred_element_type=jnp.float32)
    logits = logits + b2_ref[...]

    # Numerically-stable softmax over the feature axis.
    m = jnp.max(logits, axis=1, keepdims=True)
    e = jnp.exp(logits - m)
    s = jnp.sum(e, axis=1, keepdims=True)
    probs = e / s                                          # exact divide (free)

    # Store only the real out_features columns -> narrow f32 HBM writeback.
    o_ref[...] = probs[:, : o_ref.shape[1]].astype(o_ref.dtype)


def neural_network_forward(x, w1, b1, w2, b2, *, tile_b=4096):
    """x: (B, in_features) f32. Returns softmax probs (B, out_features) f32."""
    B, in_features = x.shape
    hidden = w1.shape[1]
    out_features = w2.shape[1]

    out_pad = _round_up(out_features, LANES)       # lane-dense logits in VMEM

    # Sublane-aligned batch tile; no batch padding copy (partial last block is
    # handled by masked block reads / writes via grid = cdiv(B, tile_b)).
    tile_b = max(8, min(tile_b, _round_up(B, 8)))
    if B > 8:
        # Guarantee >= 2 grid steps so both v7x TensorCores get work
        # (free on single-TC v5e/v6e).
        tile_b = min(tile_b, _round_up(pl.cdiv(B, 2), 8))
    grid = (pl.cdiv(B, tile_b),)

    # Tiny weight-side prep (negligible vs. x / out traffic).
    w1_f = w1.astype(jnp.float32)
    b1_f = b1.reshape(1, hidden).astype(jnp.float32)
    w2_p = jnp.zeros((hidden, out_pad), jnp.float32).at[:, :out_features].set(
        w2.astype(jnp.float32))
    b2_p = jnp.full((1, out_pad), NEG_INF, jnp.float32).at[:, :out_features].set(
        b2.reshape(1, out_features).astype(jnp.float32))

    return pl.pallas_call(
        mlp_softmax_kernel,
        out_shape=jax.ShapeDtypeStruct((B, out_features), jnp.float32),
        grid_spec=pl.GridSpec(
            grid=grid,
            in_specs=[
                pl.BlockSpec((tile_b, in_features), lambda i: (i, 0)),  # x tile
                pl.BlockSpec((in_features, hidden), lambda i: (0, 0)),  # w1 resident
                pl.BlockSpec((1, hidden), lambda i: (0, 0)),            # b1 resident
                pl.BlockSpec((hidden, out_pad), lambda i: (0, 0)),      # w2 resident
                pl.BlockSpec((1, out_pad), lambda i: (0, 0)),           # b2 resident
            ],
            out_specs=pl.BlockSpec((tile_b, out_features), lambda i: (i, 0)),
        ),
        compiler_params=pltpu.CompilerParams(
            dimension_semantics=("parallel",),        # independent per-row work
            vmem_limit_bytes=32 * 1024 * 1024,        # safe on v5e/v6e/v7x budgets
        ),
    )(x.astype(jnp.float32), w1_f, b1_f, w2_p, b2_p)


def reference_forward(x, w1, b1, w2, b2):
    h = jnp.maximum(x @ w1 + b1.reshape(1, -1), 0.0)
    logits = h @ w2 + b2.reshape(1, -1)
    return jax.nn.softmax(logits, axis=1)


def init_params(key, in_features, hidden, out_features):
    # Mimics PyTorch nn.Linear init: uniform(-1/sqrt(fan_in), +1/sqrt(fan_in)).
    k1, k2, k3, k4 = jax.random.split(key, 4)
    bound1 = 1.0 / jnp.sqrt(in_features)
    bound2 = 1.0 / jnp.sqrt(hidden)
    w1 = jax.random.uniform(k1, (in_features, hidden), jnp.float32, -bound1, bound1)
    b1 = jax.random.uniform(k2, (hidden,), jnp.float32, -bound1, bound1)
    w2 = jax.random.uniform(k3, (hidden, out_features), jnp.float32, -bound2, bound2)
    b2 = jax.random.uniform(k4, (out_features,), jnp.float32, -bound2, bound2)
    return w1, b1, w2, b2


if __name__ == "__main__":
    in_features = 32
    hidden = 64          # fixed by the PyTorch module
    out_features = 16
    batch = 8

    key = jax.random.PRNGKey(0)
    kx, kp = jax.random.split(key)
    x = jax.random.normal(kx, (batch, in_features), jnp.float32)
    w1, b1, w2, b2 = init_params(kp, in_features, hidden, out_features)

    out = neural_network_forward(x, w1, b1, w2, b2)
    jax.block_until_ready(out)

    assert out.shape == (batch, out_features)
    # Rows of a softmax sum to 1 (f32 matmuls + exact divide => tight tol).
    assert jnp.allclose(jnp.sum(out, axis=1), 1.0, atol=1e-5)
    # Match a pure-JAX f32 reference.
    ref = reference_forward(x, w1, b1, w2, b2)
    assert jnp.allclose(out, ref, atol=1e-5), float(jnp.max(jnp.abs(out - ref)))

    print("KERNEL_OK")
</pallas_src>

<mosaic_0001>
module attributes {stable_mosaic.version = 11 : i64} {
  func.func @mlp_softmax_kernel(%arg0: i32, %arg1: memref<8x32xf32, #tpu.memory_space<vmem>>, %arg2: memref<32x64xf32, #tpu.memory_space<vmem>>, %arg3: memref<1x64xf32, #tpu.memory_space<vmem>>, %arg4: memref<64x128xf32, #tpu.memory_space<vmem>>, %arg5: memref<1x128xf32, #tpu.memory_space<vmem>>, %arg6: memref<8x16xf32, #tpu.memory_space<vmem>>) attributes {dimension_semantics = [#tpu.dimension_semantics<parallel>], iteration_bounds = array<i64: 1>, scalar_prefetch = 0 : i64, scratch_operands = 0 : i64, tpu.core_type = #tpu.core_type<tc>, window_params = [{transform_indices = @transform_0, window_bounds = array<i64: 8, 32>}, {pipeline_mode = #tpu.pipeline_mode<synchronous>, transform_indices = @transform_1, window_bounds = array<i64: 32, 64>}, {pipeline_mode = #tpu.pipeline_mode<synchronous>, transform_indices = @transform_2, window_bounds = array<i64: 1, 64>}, {pipeline_mode = #tpu.pipeline_mode<synchronous>, transform_indices = @transform_3, window_bounds = array<i64: 64, 128>}, {pipeline_mode = #tpu.pipeline_mode<synchronous>, transform_indices = @transform_4, window_bounds = array<i64: 1, 128>}, {transform_indices = @transform_5, window_bounds = array<i64: 8, 16>}]} {
    %c0 = arith.constant 0 : index
    %c0_0 = arith.constant 0 : index
    %0 = vector.load %arg1[%c0, %c0_0] : memref<8x32xf32, #tpu.memory_space<vmem>>, vector<8x32xf32>
    %c0_1 = arith.constant 0 : index
    %c0_2 = arith.constant 0 : index
    %1 = vector.load %arg2[%c0_1, %c0_2] : memref<32x64xf32, #tpu.memory_space<vmem>>, vector<32x64xf32>
    %cst = arith.constant dense<0.000000e+00> : vector<8x64xf32>
    %2 = tpu.matmul %0, %1, %cst {dimension_numbers = #tpu.dot_dimension_numbers<[1], [0], [0], [1], [0, 0, 1, 1], [], []>} : vector<8x32xf32>, vector<32x64xf32>, vector<8x64xf32> -> vector<8x64xf32>
    %c0_3 = arith.constant 0 : index
    %c0_4 = arith.constant 0 : index
    %3 = vector.load %arg3[%c0_3, %c0_4] : memref<1x64xf32, #tpu.memory_space<vmem>>, vector<1x64xf32>
    %4 = vector.broadcast %3 : vector<1x64xf32> to vector<8x64xf32>
    %5 = arith.addf %2, %4 : vector<8x64xf32>
    %cst_5 = arith.constant 0.000000e+00 : f32
    %6 = vector.broadcast %cst_5 : f32 to vector<8x64xf32>
    %7 = arith.maximumf %5, %6 : vector<8x64xf32>
    %c0_6 = arith.constant 0 : index
    %c0_7 = arith.constant 0 : index
    %8 = vector.load %arg4[%c0_6, %c0_7] : memref<64x128xf32, #tpu.memory_space<vmem>>, vector<64x128xf32>
    %cst_8 = arith.constant dense<0.000000e+00> : vector<8x128xf32>
    %9 = tpu.matmul %7, %8, %cst_8 {dimension_numbers = #tpu.dot_dimension_numbers<[1], [0], [0], [1], [0, 0, 1, 1], [], []>} : vector<8x64xf32>, vector<64x128xf32>, vector<8x128xf32> -> vector<8x128xf32>
    %c0_9 = arith.constant 0 : index
    %c0_10 = arith.constant 0 : index
    %10 = vector.load %arg5[%c0_9, %c0_10] : memref<1x128xf32, #tpu.memory_space<vmem>>, vector<1x128xf32>
    %11 = vector.broadcast %10 : vector<1x128xf32> to vector<8x128xf32>
    %12 = arith.addf %9, %11 : vector<8x128xf32>
    %cst_11 = arith.constant dense<0xFF800000> : vector<8xf32>
    %13 = vector.multi_reduction <maximumf>, %12, %cst_11 [1] : vector<8x128xf32> to vector<8xf32>
    %14 = vector.shape_cast %13 : vector<8xf32> to vector<8x1xf32>
    %15 = vector.broadcast %14 : vector<8x1xf32> to vector<8x128xf32>
    %16 = arith.subf %12, %15 : vector<8x128xf32>
    %17 = math.exp %16 : vector<8x128xf32>
    %cst_12 = arith.constant dense<0.000000e+00> : vector<8xf32>
    %18 = vector.multi_reduction <add>, %17, %cst_12 [1] : vector<8x128xf32> to vector<8xf32>
    %19 = vector.shape_cast %18 : vector<8xf32> to vector<8x1xf32>
    %20 = vector.broadcast %19 : vector<8x1xf32> to vector<8x128xf32>
    %21 = arith.divf %17, %20 : vector<8x128xf32>
    %22 = vector.extract_strided_slice %21 {offsets = [0, 0], sizes = [8, 16], strides = [1, 1]} : vector<8x128xf32> to vector<8x16xf32>
    %c0_13 = arith.constant 0 : index
    %c0_14 = arith.constant 0 : index
    %23 = vector.load %arg6[%c0_13, %c0_14] : memref<8x16xf32, #tpu.memory_space<vmem>>, vector<8x16xf32>
    tpu.vector_store %arg6[%c0_13, %c0_14], %22 {strides = array<i32>} : memref<8x16xf32, #tpu.memory_space<vmem>>, vector<8x16xf32>,
    return
  }
  func.func @transform_0(%arg0: i32) -> (i32, i32) {
    %c0_i32 = arith.constant 0 : i32
    %c0_i32_0 = arith.constant 0 : i32
    return %arg0, %c0_i32 : i32, i32
  }
  func.func @transform_1(%arg0: i32) -> (i32, i32) {
    %c0_i32 = arith.constant 0 : i32
    %c0_i32_0 = arith.constant 0 : i32
    %c0_i32_1 = arith.constant 0 : i32
    return %c0_i32, %c0_i32_0 : i32, i32
  }
  func.func @transform_2(%arg0: i32) -> (i32, i32) {
    %c0_i32 = arith.constant 0 : i32
    %c0_i32_0 = arith.constant 0 : i32
    %c0_i32_1 = arith.constant 0 : i32
    return %c0_i32, %c0_i32_0 : i32, i32
  }
  func.func @transform_3(%arg0: i32) -> (i32, i32) {
    %c0_i32 = arith.constant 0 : i32
    %c0_i32_0 = arith.constant 0 : i32
    %c0_i32_1 = arith.constant 0 : i32
    return %c0_i32, %c0_i32_0 : i32, i32
  }
  func.func @transform_4(%arg0: i32) -> (i32, i32) {
    %c0_i32 = arith.constant 0 : i32
    %c0_i32_0 = arith.constant 0 : i32
    %c0_i32_1 = arith.constant 0 : i32
    return %c0_i32, %c0_i32_0 : i32, i32
  }
  func.func @transform_5(%arg0: i32) -> (i32, i32) {
    %c0_i32 = arith.constant 0 : i32
    %c0_i32_0 = arith.constant 0 : i32
    return %arg0, %c0_i32 : i32, i32
  }
}

</mosaic_0001>

<llo_original>
// kernel: tpu_custom_call.1
$region0: #{tpu_custom_call.1}
  #allocation0 [shape = 'u32[]', space=smem, size = 0x4, offset = 0x4, fixed_abs, tag = 'smem constant byte address 0x4 - core index']
  #allocation1 [shape = 'u32[72,128]{1,0:T(1,128)}', space=vmem, size = 0x9000, scoped, tag = 'internal scratch']
  %s0 = inlined_call_operand.hbm [shape: f32[8,32], index: 0, kind: input, shape index: {}]
  %s1 = inlined_call_operand.hbm [shape: f32[32,64], index: 1, kind: input, shape index: {}]
  %s2 = inlined_call_operand.vmem [shape: f32[1,64], index: 2, kind: input, shape index: {}]
  %s3 = inlined_call_operand.hbm [shape: f32[64,128], index: 3, kind: input, shape index: {}]
  %s4 = inlined_call_operand.vmem [shape: f32[1,128], index: 4, kind: input, shape index: {}]
  %s5 = inlined_call_operand.hbm [shape: f32[8,16], index: 5, kind: output, shape index: {}]
  %s6 = sld [smem:[#allocation0]]
  $region42: #{tpu_custom_call.1} parent=0
    _
  %s8 = ssub.s32 1, %s6
  %s9 = scalar_select 0, %s8, %s6
  $region1: #{tpu_custom_call.1} parent=0
    #allocation2 [shape = 'u8[4096]{0}', space=vmem, size = 0x1000, scoped, tag = 'input window, operand 0, single buffered']
    #allocation3 [shape = 's32[1]{0}', space=sflag, size = 0x4, scoped, tag = 'scoped memory for tpu_custom_call.1']
    #allocation4 [shape = 's32[1]{0}', space=sflag, size = 0x4, scoped, tag = 'scoped memory for tpu_custom_call.1']
    #allocation5 [shape = 'u8[16384]{0}', space=vmem, size = 0x4000, scoped, tag = 'input window, operand 1, single buffered']
    #allocation6 [shape = 's32[1]{0}', space=sflag, size = 0x4, scoped, tag = 'scoped memory for tpu_custom_call.1']
    #allocation7 [shape = 'u8[32768]{0}', space=vmem, size = 0x8000, scoped, tag = 'input window, operand 3, single buffered']
    #allocation8 [shape = 'u8[4096]{0}', space=vmem, size = 0x1000, scoped, tag = 'output window, operand 0, single buffered']
    %10 = vsyncpa [#allocation3], 0
    %11 = vsyncpa [#allocation6], 0
    %12 = vsyncpa [#allocation4], 0
    // Predicated region
    $region2: #{tpu_custom_call.1} parent=1 // pred_check
      _
    $region3: #{tpu_custom_call.1} parent=1 // pred_check_branch
      %14 = sbr.rel (0) target = $region5
    $region4: #{tpu_custom_call.1} parent=1 // pred_region
      %16 = vsyncadd [#allocation3], 0
      %s18 = sshll.u32 %s0, 4
      %s19 = int_to_ptr.hbm [resolvable:$true] %s18
      %s20 = sshll.u32 [#allocation2], 4
      %s21 = int_to_ptr.vmem [resolvable:$true] %s20
      %23 = dma.hbm_to_vmem [thread:$0]  %s19, 128, %s21, [#allocation3]
    $region5: #{tpu_custom_call.1} parent=1 // pred_fallthru
      _
    // Predicated region
    $region6: #{tpu_custom_call.1} parent=1 // pred_check
      _
    $region7: #{tpu_custom_call.1} parent=1 // pred_check_branch
      %25 = sbr.rel (0) target = $region9
    $region8: #{tpu_custom_call.1} parent=1 // pred_region
      %27 = vsyncadd [#allocation6], 0
      %s28 = sshll.u32 %s1, 4
      %s29 = int_to_ptr.hbm [resolvable:$true] %s28
      %s30 = sshll.u32 [#allocation5], 4
      %s31 = int_to_ptr.vmem [resolvable:$true] %s30
      %36 = dma.hbm_to_vmem [thread:$0]  %s29, 512, %s31, [#allocation6], 128, 128, 8
    $region9: #{tpu_custom_call.1} parent=1 // pred_fallthru
      _
    // Predicated region
    $region10: #{tpu_custom_call.1} parent=1 // pred_check
      _
    $region11: #{tpu_custom_call.1} parent=1 // pred_check_branch
      %38 = sbr.rel (0) target = $region13
    $region12: #{tpu_custom_call.1} parent=1 // pred_region
      _
    $region13: #{tpu_custom_call.1} parent=1 // pred_fallthru
      _
    // Predicated region
    $region14: #{tpu_custom_call.1} parent=1 // pred_check
      _
    $region15: #{tpu_custom_call.1} parent=1 // pred_check_branch
      %40 = sbr.rel (0) target = $region17
    $region16: #{tpu_custom_call.1} parent=1 // pred_region
      %42 = vsyncadd [#allocation6], 0
      %s43 = sshll.u32 %s3, 4
      %s44 = int_to_ptr.hbm [resolvable:$true] %s43
      %s45 = sshll.u32 [#allocation7], 4
      %s46 = int_to_ptr.vmem [resolvable:$true] %s45
      %51 = dma.hbm_to_vmem [thread:$0]  %s44, 1024, %s46, [#allocation6], 128, 128, 8
    $region17: #{tpu_custom_call.1} parent=1 // pred_fallthru
      _
    // Predicated region
    $region18: #{tpu_custom_call.1} parent=1 // pred_check
      _
    $region19: #{tpu_custom_call.1} parent=1 // pred_check_branch
      %53 = sbr.rel (0) target = $region21
    $region20: #{tpu_custom_call.1} parent=1 // pred_region
      _
    $region21: #{tpu_custom_call.1} parent=1 // pred_fallthru
      _
    // Predicated region
    $region22: #{tpu_custom_call.1} parent=1 // pred_check
      _
    $region23: #{tpu_custom_call.1} parent=1 // pred_check_branch
      %55 = sbr.rel (0) target = $region25
    $region24: #{tpu_custom_call.1} parent=1 // pred_region
      %57 = dma.done [#allocation3], 128
    $region25: #{tpu_custom_call.1} parent=1 // pred_fallthru
      _
    // Predicated region
    $region26: #{tpu_custom_call.1} parent=1 // pred_check
      _
    $region27: #{tpu_custom_call.1} parent=1 // pred_check_branch
      %59 = sbr.rel (0) target = $region29
    $region28: #{tpu_custom_call.1} parent=1 // pred_region
      %61 = dma.done [#allocation6], 512
    $region29: #{tpu_custom_call.1} parent=1 // pred_fallthru
      _
    // Predicated region
    $region30: #{tpu_custom_call.1} parent=1 // pred_check
      _
    $region31: #{tpu_custom_call.1} parent=1 // pred_check_branch
      %63 = sbr.rel (0) target = $region33
    $region32: #{tpu_custom_call.1} parent=1 // pred_region
      %65 = dma.done [#allocation6], 1024
    $region33: #{tpu_custom_call.1} parent=1 // pred_fallthru
      _
    %v66 = vld [vmem:[#allocation2] sm:$0xff]
    %v67 = vld [vmem:[#allocation5] sm:$0xff]
    %v68 = vld [vmem:[#allocation5 + $0x8] sm:$0xff]
    %v69 = vld [vmem:[#allocation5 + $0x10] sm:$0xff]
    %v70 = vld [vmem:[#allocation5 + $0x18] sm:$0xff]
    %v71 = vld [vmem:[%s2] sm:$0x1]
    %v73 = vperm.slane %v71, 0
    %vm75 = vcmask 261120
    %v77 = vsel %vm75, %v66, 0
    %79 = vmatpush.msra.mxu0 0.0
    %80 = vmatpush.msra.mxu0 0.0
    %81 = vmatpush.msra.mxu0 0.0
    %82 = vmatpush.msra.mxu0 0.0
    %83 = vmatpush.msra.mxu0 0.0
    %84 = vmatpush.msra.mxu0 0.0
    %85 = vmatpush.msra.mxu0 0.0
    %86 = vmatpush.msra.mxu0 0.0
    %87 = vmatpush.msra.mxu0 0.0
    %88 = vmatpush.msra.mxu0 0.0
    %89 = vmatpush.msra.mxu0 0.0
    %90 = vmatpush.msra.mxu0 0.0
    %91 = vmatpush.msra.mxu0 %v70
    %92 = vmatpush.msra.mxu0 %v69
    %93 = vmatpush.msra.mxu0 %v68
    %94 = vmatpush.msra.mxu0 %v67
    %95 = vmatmul.f32.gmra.mxu0 %v77
    %v96 = vpop.f32.mrf.mxu0
    %v97 = vadd.f32 %v73, %v96
    %98 = vdwg.mxu0
    %v99 = vmax.f32 %v97, 0.0
    %v100 = vld [vmem:[#allocation7] sm:$0xff]
    %v101 = vld [vmem:[#allocation7 + $0x8] sm:$0xff]
    %v102 = vld [vmem:[#allocation7 + $0x10] sm:$0xff]
    %v103 = vld [vmem:[#allocation7 + $0x18] sm:$0xff]
    %v104 = vld [vmem:[#allocation7 + $0x20] sm:$0xff]
    %v105 = vld [vmem:[#allocation7 + $0x28] sm:$0xff]
    %v106 = vld [vmem:[#allocation7 + $0x30] sm:$0xff]
    %v107 = vld [vmem:[#allocation7 + $0x38] sm:$0xff]
    %v108 = vld [vmem:[%s4] sm:$0x1]
    %v110 = vperm.slane %v108, 0
    %vm112 = vcmask 523264
    %v114 = vsel %vm112, %v99, 0
    %116 = vmatpush.msra.mxu0 0.0
    %117 = vmatpush.msra.mxu0 0.0
    %118 = vmatpush.msra.mxu0 0.0
    %119 = vmatpush.msra.mxu0 0.0
    %120 = vmatpush.msra.mxu0 0.0
    %121 = vmatpush.msra.mxu0 0.0
    %122 = vmatpush.msra.mxu0 0.0
    %123 = vmatpush.msra.mxu0 0.0
    %124 = vmatpush.msra.mxu0 %v107
    %125 = vmatpush.msra.mxu0 %v106
    %126 = vmatpush.msra.mxu0 %v105
    %127 = vmatpush.msra.mxu0 %v104
    %128 = vmatpush.msra.mxu0 %v103
    %129 = vmatpush.msra.mxu0 %v102
    %130 = vmatpush.msra.mxu0 %v101
    %131 = vmatpush.msra.mxu0 %v100
    %132 = vmatmul.f32.gmra.mxu0 %v114
    %v133 = vpop.f32.mrf.mxu0
    %v134 = vadd.f32 %v110, %v133
    %135 = vdwg.mxu0
    %136 = vmax.xlane.f32.xlu0 %v134
    %v137 = vpop.xlane.xlu0 %136
    %v138 = vsub.f32 %v134, %v137
    %v139 = vmul.f32 %v138, 1.442695
    %v140 = vpow.pop %v139
    %141 = vadd.xlane.f32.xlu0 %v140
    %v142 = vpop.xlane.xlu0 %141
    %v143 = vrcp.pop %v142
    %v144 = vmul.f32 %v142, %v143
    %v145 = vsub.f32 1.0, %v144
    %v146 = vmul.f32 %v143, %v145
    %v147 = vadd.f32 %v143, %v146
    %vm148 = vweird.f32 %v142
    %vm149 = vweird.f32 %v143
    %vm150 = vmor %vm148, %vm149
    %v151 = vsel %vm150, %v143, %v147
    %v152 = vand.u32 2147483647, %v142
    %vm153 = vcmp.eq.f32.partialorder %v152, 8.507059e+37
    %v154 = vand.u32 %v142, 2147483648
    %v155 = vor.u32 1.1754944e-38, %v154
    %v156 = vsel %vm153, %v155, %v151
    %v157 = vmul.f32 %v140, %v156
    %vm158 = vcmask 130048
    %159 = vst.msk [vmem:[#allocation8] sm:$0xff] %vm158, %v157
    // Predicated region
    $region34: #{tpu_custom_call.1} parent=1 // pred_check
      _
    $region35: #{tpu_custom_call.1} parent=1 // pred_check_branch
      %161 = sbr.rel (0) target = $region37
    $region36: #{tpu_custom_call.1} parent=1 // pred_region
      %163 = vsyncadd [#allocation4], 0
      %s165 = sshll.u32 [#allocation8], 4
      %s166 = int_to_ptr.vmem [resolvable:$true] %s165
      %s167 = sshll.u32 %s5, 4
      %s168 = int_to_ptr.hbm [resolvable:$true] %s167
      %170 = dma.vmem_to_hbm [thread:$0]  %s166, 128, %s168, [#allocation4]
    $region37: #{tpu_custom_call.1} parent=1 // pred_fallthru
      _
    // Predicated region
    $region38: #{tpu_custom_call.1} parent=1 // pred_check
      _
    $region39: #{tpu_custom_call.1} parent=1 // pred_check_branch
      %172 = sbr.rel (0) target = $region41
    $region40: #{tpu_custom_call.1} parent=1 // pred_region
      %174 = dma.done [#allocation4], 128
    $region41: #{tpu_custom_call.1} parent=1 // pred_fallthru
      _
    %175 = vsyncpa [#allocation3], 1
    %176 = vsyncpa [#allocation6], 1
    %177 = vsyncpa [#allocation4], 1

</llo_original>
